<compile_context>
chip_gen: v5e
topology: v5e:2x2
jax: 0.10.0
libtpu: 0.0.40
codegen_flags: <defaults>
</compile_context>

<pallas_src>
import math
from functools import partial

import jax
import jax.numpy as jnp
from jax.experimental import pallas as pl
from jax.experimental.pallas import tpu as pltpu


_NCORE_SPLIT = 2                       # shard the reduction across TCs on v7x; harmless on 1-TC chips
_VMEM_LIMIT_BYTES = 48 << 20           # explicit scoped-VMEM limit (v5e default is only 16 MiB)
_DEFAULT_RESIDENT_MAX_BYTES = 6 << 20  # W (in its own dtype) up to this size takes the resident path
_DEFAULT_TARGET_BLOCK_BYTES = 4 << 20  # streaming-path tile target (amortizes ~0.35 us/step overhead)


def _cdiv(a: int, b: int) -> int:
    return -(-a // b)


def _round_up(x: int, mult: int) -> int:
    return _cdiv(x, mult) * mult


# --------------------------------------------------------------------------------------
# Kernel A: VMEM-resident full spectral norm (1 read + 1 write of W).
# --------------------------------------------------------------------------------------
def _resident_kernel(u_ref, w_ref, o_ref, u_out_ref, *, T, eps):
    w = w_ref[...]                                   # (m_pad, d_pad), native dtype
    u = u_ref[...]                                   # (m_pad, 1) float32 column
    u_norm = jnp.float32(0.0)
    for _ in range(T):
        # v_raw = u^T W  -> (1, d_pad); both operands contract over their sublane axis.
        # (vectors are cast to W's dtype for the MXU; accumulation stays f32)
        v = jax.lax.dot_general(u.astype(w.dtype), w,
                                dimension_numbers=(((0,), (0,)), ((), ())),
                                preferred_element_type=jnp.float32)
        v = v * (1.0 / (jnp.sqrt(jnp.sum(v * v)) + eps))
        # u_raw (column) = W v^T -> (m_pad, 1); the transpose falls on the tiny v operand.
        u = jax.lax.dot_general(w, v.astype(w.dtype),
                                dimension_numbers=(((1,), (1,)), ((), ())),
                                preferred_element_type=jnp.float32)
        u_norm = jnp.sqrt(jnp.sum(u * u))
        u = u * (1.0 / (u_norm + eps))
    # sigma = u W v^T = ||u_raw||^2 / (||u_raw|| + eps)   (identity, see module header)
    sigma = (u_norm * u_norm) / (u_norm + eps)
    inv_sigma = 1.0 / sigma
    o_ref[...] = (w.astype(jnp.float32) * inv_sigma).astype(o_ref.dtype)
    u_out_ref[...] = u


# --------------------------------------------------------------------------------------
# Kernel B: fused power-iteration pass (one read of W per iteration).
#   per d-tile:   v_tile = u @ W_tile ;  u_unscaled += W_tile @ v_tile^T
#   grid = (core_split, d_tiles) = ("parallel", "arbitrary"); per-core partial outputs.
# --------------------------------------------------------------------------------------
def _fused_power_kernel(u_ref, w_ref, uacc_ref, *, d_total, tile_d, blocks_per_core):
    c = pl.program_id(0)          # core-split index ("parallel")
    k = pl.program_id(1)          # d-tile index within this split ("arbitrary")

    @pl.when(k == 0)
    def _init():
        uacc_ref[...] = jnp.zeros_like(uacc_ref)

    # Zero out-of-range lanes: handles the partial last tile and any duplicated
    # (index-clamped) tiles, so W never needs padding/copies in HBM.
    tile_idx = c * blocks_per_core + k
    col0 = tile_idx * tile_d
    lane = col0 + jax.lax.broadcasted_iota(jnp.int32, (1, tile_d), 1)
    w = jnp.where(lane < d_total, w_ref[...], 0)

    # v_tile = u @ W_tile  -> (1, tile_d), f32 accumulation on the MXU.
    v = jax.lax.dot_general(u_ref[...].astype(w.dtype), w,
                            dimension_numbers=(((1,), (0,)), ((), ())),
                            preferred_element_type=jnp.float32)
    # u_partial += W_tile @ v_tile^T -> (m, 1); transpose falls on the tiny v, not W.
    u_part = jax.lax.dot_general(w, v.astype(w.dtype),
                                 dimension_numbers=(((1,), (1,)), ((), ())),
                                 preferred_element_type=jnp.float32)
    uacc_ref[...] += u_part[None, :, :]


# --------------------------------------------------------------------------------------
# Kernel C: out_tile = W_tile * (1/sigma)   (inv_sigma scalar lives in SMEM)
# --------------------------------------------------------------------------------------
def _scale_kernel(inv_sigma_ref, w_ref, o_ref):
    o_ref[...] = (w_ref[...].astype(jnp.float32) * inv_sigma_ref[0]).astype(o_ref.dtype)


# --------------------------------------------------------------------------------------
# Wrappers
# --------------------------------------------------------------------------------------
def _spectral_norm_resident(W, u, orig_shape, T, eps):
    m, d = W.shape
    itemsize = jnp.dtype(W.dtype).itemsize
    m_pad = _round_up(m, 8)
    d_pad = _round_up(d, 128)
    # zero padding does not change any norm, matvec or sigma; sliced away at the end.
    W_p = W if (m_pad, d_pad) == (m, d) else jnp.pad(W, ((0, m_pad - m), (0, d_pad - d)))
    u_col = u.reshape(m, 1).astype(jnp.float32)
    if m_pad != m:
        u_col = jnp.pad(u_col, ((0, m_pad - m), (0, 0)))

    out_p, u_out = pl.pallas_call(
        partial(_resident_kernel, T=T, eps=eps),
        out_shape=(jax.ShapeDtypeStruct((m_pad, d_pad), W.dtype),
                   jax.ShapeDtypeStruct((m_pad, 1), jnp.float32)),
        in_specs=[pl.BlockSpec(memory_space=pltpu.MemorySpace.VMEM),
                  pl.BlockSpec(memory_space=pltpu.MemorySpace.VMEM)],
        out_specs=(pl.BlockSpec(memory_space=pltpu.MemorySpace.VMEM),
                   pl.BlockSpec(memory_space=pltpu.MemorySpace.VMEM)),
        compiler_params=pltpu.CompilerParams(vmem_limit_bytes=_VMEM_LIMIT_BYTES),
        cost_estimate=pl.CostEstimate(
            flops=int((4 * T + 1) * m_pad * d_pad),
            transcendentals=int(2 * T + 1),
            bytes_accessed=int(2 * m_pad * d_pad * itemsize + 8 * m_pad)),
    )(u_col, W_p)

    out = out_p[:m, :d].reshape(orig_shape)
    u_new = u_out[:m, 0].reshape(1, m)
    return out, u_new


def _spectral_norm_tiled(W, u, orig_shape, T, eps, target_block_bytes):
    m, d = W.shape
    itemsize = jnp.dtype(W.dtype).itemsize

    # Tile planning: biggest lane-dense tiles hitting the byte target, count rounded so the
    # d-tiles split evenly across the core-split axis when possible (no divisibility
    # requirement on d: edge tiles are masked in-kernel, never padded in HBM).
    n128 = _cdiv(d, 128)
    n_blocks = max(1, min(_cdiv(m * d * itemsize, target_block_bytes), n128))
    n_blocks = min(_round_up(n_blocks, _NCORE_SPLIT), n128)
    tile_d = _round_up(_cdiv(d, n_blocks), 128)
    n_blocks = _cdiv(d, tile_d)                      # true cover of d (last tile may be partial)
    blocks_per_core = _cdiv(n_blocks, _NCORE_SPLIT)

    fused = pl.pallas_call(
        partial(_fused_power_kernel, d_total=d, tile_d=tile_d,
                blocks_per_core=blocks_per_core),
        out_shape=jax.ShapeDtypeStruct((_NCORE_SPLIT, m, 1), jnp.float32),
        grid=(_NCORE_SPLIT, blocks_per_core),
        in_specs=[
            pl.BlockSpec((1, m), lambda c, k: (0, 0)),
            # clamp duplicated tail tiles onto a valid window (their lanes get masked to 0)
            pl.BlockSpec((m, tile_d),
                         lambda c, k: (0, jnp.minimum(c * blocks_per_core + k,
                                                      n_blocks - 1))),
        ],
        out_specs=pl.BlockSpec((1, m, 1), lambda c, k: (c, 0, 0)),
        compiler_params=pltpu.CompilerParams(
            dimension_semantics=("parallel", "arbitrary"),
            vmem_limit_bytes=_VMEM_LIMIT_BYTES),
        cost_estimate=pl.CostEstimate(
            flops=int(4 * m * d), transcendentals=0,
            bytes_accessed=int(m * d * itemsize + 8 * m)),
    )

    scale = pl.pallas_call(
        _scale_kernel,
        out_shape=jax.ShapeDtypeStruct((m, d), W.dtype),
        grid=(n_blocks,),
        in_specs=[pl.BlockSpec(memory_space=pltpu.MemorySpace.SMEM),
                  pl.BlockSpec((m, tile_d), lambda k: (0, k))],
        out_specs=pl.BlockSpec((m, tile_d), lambda k: (0, k)),
        compiler_params=pltpu.CompilerParams(
            dimension_semantics=("parallel",),
            vmem_limit_bytes=_VMEM_LIMIT_BYTES),
        cost_estimate=pl.CostEstimate(
            flops=int(m * d), transcendentals=0,
            bytes_accessed=int(2 * m * d * itemsize)),
    )

    # Power iteration: one fused pass over W per iteration; tiny (1, m)-vector glue in JAX.
    u_row = u.reshape(1, m).astype(jnp.float32)
    u_norm = jnp.float32(0.0)
    for _ in range(T):
        uacc = fused(u_row, W)                               # (NC, m, 1) f32 per-core partials
        u_unscaled = jnp.sum(uacc, axis=(0, 2))              # (m,)  == W @ v_raw^T
        # ||v_raw||^2 = v_raw v_raw^T = u_prev W v_raw^T = u_prev . u_unscaled
        vsq = jnp.maximum(jnp.sum(u_row[0] * u_unscaled), 0.0)
        v_norm = jnp.sqrt(vsq)
        u_raw = u_unscaled / (v_norm + eps)                  # == (normalized v) @ W^T
        u_norm = jnp.sqrt(jnp.sum(u_raw * u_raw))
        u_row = (u_raw / (u_norm + eps)).reshape(1, m)

    # sigma = u W v^T = ||u_raw||^2 / (||u_raw|| + eps)  (identity, see module header)
    sigma = (u_norm * u_norm) / (u_norm + eps)
    inv_sigma = jnp.reshape(1.0 / sigma, (1,)).astype(jnp.float32)
    out = scale(inv_sigma, W).reshape(orig_shape)
    return out, u_row


def spectral_norm(weight: jax.Array, u: jax.Array, *, T: int = 1, eps: float = 1e-12,
                  resident_max_bytes: int = _DEFAULT_RESIDENT_MAX_BYTES,
                  target_block_bytes: int = _DEFAULT_TARGET_BLOCK_BYTES):
    """Functional SpectralNorm.forward: returns (weight / sigma, updated u)."""
    if T < 1:
        raise ValueError('Power iteration should be a positive integer')

    orig_shape = weight.shape
    m = orig_shape[0]
    d = math.prod(orig_shape[1:])
    itemsize = jnp.dtype(weight.dtype).itemsize
    W = weight.reshape(m, d)

    # NOTE: low-precision (bf16) weights still cast the f32 iterate down to the weight
    # dtype when feeding the MXU; accumulation is always f32 via preferred_element_type.
    if m * d * itemsize <= resident_max_bytes:
        return _spectral_norm_resident(W, u, orig_shape, T, eps)
    return _spectral_norm_tiled(W, u, orig_shape, T, eps, target_block_bytes)


# --------------------------------------------------------------------------------------
# Pure-JAX transcription of the PyTorch module, for correctness checking.
# --------------------------------------------------------------------------------------
def _spectral_norm_reference(weight, u, T=1, eps=1e-12):
    m = weight.shape[0]
    Wm = weight.reshape(m, -1).astype(jnp.float32)
    _u = u.astype(jnp.float32)
    _v = None
    for _ in range(T):
        _v = _u @ Wm
        _v = _v / (jnp.linalg.norm(_v) + eps)
        _u = _v @ Wm.T
        _u = _u / (jnp.linalg.norm(_u) + eps)
    sigma = jnp.sum((_u @ Wm) * _v)
    return (weight / sigma).astype(weight.dtype), _u


if __name__ == "__main__":
    key = jax.random.PRNGKey(0)
    k1, k2, k3, k4 = jax.random.split(key, 4)

    fn = jax.jit(spectral_norm,
                 static_argnames=("T", "eps", "resident_max_bytes", "target_block_bytes"))

    # ---- case 1: VMEM-resident fast path (typical small conv weight), T = 1 ----------
    w1 = jax.random.normal(k1, (8, 4, 4, 4), dtype=jnp.float32)      # C_out=8, C_in=4, 4x4
    u1 = jax.random.normal(k2, (1, 8), dtype=jnp.float32)
    out1, u1_new = fn(w1, u1, T=1)
    out1 = jax.block_until_ready(out1)
    u1_new = jax.block_until_ready(u1_new)
    assert out1.shape == w1.shape and out1.dtype == w1.dtype
    assert u1_new.shape == u1.shape
    ref1, uref1 = _spectral_norm_reference(w1, u1, T=1)
    assert jnp.allclose(out1, ref1, atol=1e-5, rtol=1e-4), (
        f"resident T=1 mismatch, max abs err = {float(jnp.max(jnp.abs(out1 - ref1)))}")
    assert jnp.allclose(u1_new, uref1, atol=1e-5, rtol=1e-4), "resident T=1 u mismatch"

    # ---- case 2: resident path with T = 3 power iterations ---------------------------
    out2, u2_new = fn(w1, u1, T=3)
    out2 = jax.block_until_ready(out2)
    u2_new = jax.block_until_ready(u2_new)
    ref2, uref2 = _spectral_norm_reference(w1, u1, T=3)
    assert jnp.allclose(out2, ref2, atol=1e-5, rtol=1e-4), (
        f"resident T=3 mismatch, max abs err = {float(jnp.max(jnp.abs(out2 - ref2)))}")
    assert jnp.allclose(u2_new, uref2, atol=1e-5, rtol=1e-4), "resident T=3 u mismatch"

    # ---- case 3: streaming / tiled path (thresholds forced down so a small weight
    #      exercises the multi-tile grid, the core-split axis and the partial-tile mask).
    w3 = jax.random.normal(k3, (16, 12, 5, 5), dtype=jnp.float32)    # m=16, d=300 (unaligned)
    u3 = jax.random.normal(k4, (1, 16), dtype=jnp.float32)
    out3, u3_new = fn(w3, u3, T=2, resident_max_bytes=0, target_block_bytes=8 * 1024)
    out3 = jax.block_until_ready(out3)
    u3_new = jax.block_until_ready(u3_new)
    assert out3.shape == w3.shape and out3.dtype == w3.dtype
    ref3, uref3 = _spectral_norm_reference(w3, u3, T=2)
    assert jnp.allclose(out3, ref3, atol=1e-5, rtol=1e-4), (
        f"tiled T=2 mismatch, max abs err = {float(jnp.max(jnp.abs(out3 - ref3)))}")
    assert jnp.allclose(u3_new, uref3, atol=1e-5, rtol=1e-4), "tiled T=2 u mismatch"

    # TODO(synk): PyTorch keeps `u` as an in-place-updated module buffer; here the new
    # estimate is returned functionally for the caller to carry across steps.
    print("KERNEL_OK")
</pallas_src>

<mosaic_0001>
module attributes {stable_mosaic.version = 11 : i64} {
  func.func @_resident_kernel(%arg0: memref<8x1xf32, #tpu.memory_space<vmem>>, %arg1: memref<8x128xf32, #tpu.memory_space<vmem>>, %arg2: memref<8x128xf32, #tpu.memory_space<vmem>>, %arg3: memref<8x1xf32, #tpu.memory_space<vmem>>) attributes {dimension_semantics = [], scalar_prefetch = 0 : i64, scratch_operands = 0 : i64, tpu.core_type = #tpu.core_type<tc>} {
    %c0 = arith.constant 0 : index
    %c0_0 = arith.constant 0 : index
    %0 = vector.load %arg1[%c0, %c0_0] : memref<8x128xf32, #tpu.memory_space<vmem>>, vector<8x128xf32>
    %c0_1 = arith.constant 0 : index
    %c0_2 = arith.constant 0 : index
    %1 = vector.load %arg0[%c0_1, %c0_2] : memref<8x1xf32, #tpu.memory_space<vmem>>, vector<8x1xf32>
    %cst = arith.constant dense<0.000000e+00> : vector<1x128xf32>
    %2 = tpu.matmul %1, %0, %cst {dimension_numbers = #tpu.dot_dimension_numbers<[0], [0], [1], [1], [0, 1, 1, 1], [], []>} : vector<8x1xf32>, vector<8x128xf32>, vector<1x128xf32> -> vector<1x128xf32>
    %3 = arith.mulf %2, %2 : vector<1x128xf32>
    %4 = vector.shape_cast %3 : vector<1x128xf32> to vector<1x1x128xf32>
    %cst_3 = arith.constant dense<0.000000e+00> : vector<1xf32>
    %5 = vector.multi_reduction <add>, %4, %cst_3 [1, 2] : vector<1x1x128xf32> to vector<1xf32>
    %6 = vector.shape_cast %5 : vector<1xf32> to vector<1x1x1xf32>
    %7 = vector.extract %6[0, 0, 0] : f32 from vector<1x1x1xf32>
    %8 = math.sqrt %7 : f32
    %cst_4 = arith.constant 9.99999996E-13 : f32
    %9 = arith.addf %8, %cst_4 : f32
    %cst_5 = arith.constant 1.000000e+00 : f32
    %10 = arith.divf %cst_5, %9 : f32
    %11 = vector.broadcast %10 : f32 to vector<1x128xf32>
    %12 = arith.mulf %2, %11 : vector<1x128xf32>
    %cst_6 = arith.constant dense<0.000000e+00> : vector<8x1xf32>
    %13 = tpu.matmul %0, %12, %cst_6 {dimension_numbers = #tpu.dot_dimension_numbers<[1], [1], [0], [0], [0, 0, 1, 0], [], []>} : vector<8x128xf32>, vector<1x128xf32>, vector<8x1xf32> -> vector<8x1xf32>
    %14 = arith.mulf %13, %13 : vector<8x1xf32>
    %15 = vector.shape_cast %14 : vector<8x1xf32> to vector<1x8x1xf32>
    %cst_7 = arith.constant dense<0.000000e+00> : vector<1xf32>
    %16 = vector.multi_reduction <add>, %15, %cst_7 [1, 2] : vector<1x8x1xf32> to vector<1xf32>
    %17 = vector.shape_cast %16 : vector<1xf32> to vector<1x1x1xf32>
    %18 = vector.extract %17[0, 0, 0] : f32 from vector<1x1x1xf32>
    %19 = math.sqrt %18 : f32
    %cst_8 = arith.constant 9.99999996E-13 : f32
    %20 = arith.addf %19, %cst_8 : f32
    %cst_9 = arith.constant 1.000000e+00 : f32
    %21 = arith.divf %cst_9, %20 : f32
    %22 = vector.broadcast %21 : f32 to vector<8x1xf32>
    %23 = arith.mulf %13, %22 : vector<8x1xf32>
    %24 = arith.mulf %19, %19 : f32
    %cst_10 = arith.constant 9.99999996E-13 : f32
    %25 = arith.addf %19, %cst_10 : f32
    %26 = arith.divf %24, %25 : f32
    %cst_11 = arith.constant 1.000000e+00 : f32
    %27 = arith.divf %cst_11, %26 : f32
    %28 = vector.broadcast %27 : f32 to vector<8x128xf32>
    %29 = arith.mulf %0, %28 : vector<8x128xf32>
    %c0_12 = arith.constant 0 : index
    %c0_13 = arith.constant 0 : index
    %30 = vector.load %arg2[%c0_12, %c0_13] : memref<8x128xf32, #tpu.memory_space<vmem>>, vector<8x128xf32>
    tpu.vector_store %arg2[%c0_12, %c0_13], %29 {strides = array<i32>} : memref<8x128xf32, #tpu.memory_space<vmem>>, vector<8x128xf32>,
    %c0_14 = arith.constant 0 : index
    %c0_15 = arith.constant 0 : index
    %31 = vector.load %arg3[%c0_14, %c0_15] : memref<8x1xf32, #tpu.memory_space<vmem>>, vector<8x1xf32>
    tpu.vector_store %arg3[%c0_14, %c0_15], %23 {strides = array<i32>} : memref<8x1xf32, #tpu.memory_space<vmem>>, vector<8x1xf32>,
    return
  }
}

</mosaic_0001>

<llo_original>
// kernel: spectral_norm.1
$region0: #{spectral_norm.1}
  #allocation0 [shape = 'u32[]', space=smem, size = 0x4, offset = 0x4, fixed_abs, tag = 'smem constant byte address 0x4 - core index']
  #allocation1 [shape = 'u32[72,128]{1,0:T(1,128)}', space=vmem, size = 0x9000, scoped, tag = 'internal scratch']
  %s0 = inlined_call_operand.vmem [shape: f32[8,1], index: 0, kind: input, shape index: {}]
  %s1 = inlined_call_operand.vmem [shape: f32[8,128], index: 1, kind: input, shape index: {}]
  %s2 = inlined_call_operand.vmem [shape: f32[8,128], index: 2, kind: output, shape index: {0}]
  %s3 = inlined_call_operand.vmem [shape: f32[8,1], index: 3, kind: output, shape index: {1}]
  %4 = xla_tuple %s2, %s3
  %s5 = sld [smem:[#allocation0]]
  $region26: #{spectral_norm.1} parent=0
    _
  %s7 = ssub.s32 1, %s5
  %s8 = scalar_select 0, %s7, %s5
  // Predicated region
  $region2: #{spectral_norm.1} parent=0 // pred_check
    _
  $region3: #{spectral_norm.1} parent=0 // pred_check_branch
    %10 = sbr.rel (0) target = $region5
  $region4: #{spectral_norm.1} parent=0 // pred_region
    _
  $region5: #{spectral_norm.1} parent=0 // pred_fallthru
    _
  // Predicated region
  $region6: #{spectral_norm.1} parent=0 // pred_check
    _
  $region7: #{spectral_norm.1} parent=0 // pred_check_branch
    %12 = sbr.rel (0) target = $region9
  $region8: #{spectral_norm.1} parent=0 // pred_region
    _
  $region9: #{spectral_norm.1} parent=0 // pred_fallthru
    _
  %v13 = vld [vmem:[%s1] sm:$0xff]
  %v14 = vld [vmem:[%s0] sm:$0xff]
  %15 = vxpose.xlu0.b32.start [1/16] %v14, 128
  %16 = vxpose.xlu0.b32.cont [2/16] 0.0, 128
  %17 = vxpose.xlu0.b32.cont [3/16] 0.0, 128
  %18 = vxpose.xlu0.b32.cont [4/16] 0.0, 128
  %19 = vxpose.xlu0.b32.cont [5/16] 0.0, 128
  %20 = vxpose.xlu0.b32.cont [6/16] 0.0, 128
  %21 = vxpose.xlu0.b32.cont [7/16] 0.0, 128
  %22 = vxpose.xlu0.b32.cont [8/16] 0.0, 128
  %23 = vxpose.xlu0.b32.cont [9/16] 0.0, 128
  %24 = vxpose.xlu0.b32.cont [10/16] 0.0, 128
  %25 = vxpose.xlu0.b32.cont [11/16] 0.0, 128
  %26 = vxpose.xlu0.b32.cont [12/16] 0.0, 128
  %27 = vxpose.xlu0.b32.cont [13/16] 0.0, 128
  %28 = vxpose.xlu0.b32.cont [14/16] 0.0, 128
  %29 = vxpose.xlu0.b32.cont [15/16] 0.0, 128
  %30 = vxpose.xlu0.b32.end [16/16] 0.0, 128
  %v31 = vpop.trf.xlu0
  %v32 = vpop.trf.xlu0
  %v33 = vpop.trf.xlu0
  %v34 = vpop.trf.xlu0
  %v35 = vpop.trf.xlu0
  %v36 = vpop.trf.xlu0
  %v37 = vpop.trf.xlu0
  %v38 = vpop.trf.xlu0
  %v39 = vpop.trf.xlu0
  %v40 = vpop.trf.xlu0
  %v41 = vpop.trf.xlu0
  %v42 = vpop.trf.xlu0
  %v43 = vpop.trf.xlu0
  %v44 = vpop.trf.xlu0
  %v45 = vpop.trf.xlu0
  %v46 = vpop.trf.xlu0
  %vm47 = vcmask 64512
  %v49 = vsel %vm47, %v31, 0
  %51 = vmatpush.msra.mxu0 0.0
  %52 = vmatpush.msra.mxu0 0.0
  %53 = vmatpush.msra.mxu0 0.0
  %54 = vmatpush.msra.mxu0 0.0
  %55 = vmatpush.msra.mxu0 0.0
  %56 = vmatpush.msra.mxu0 0.0
  %57 = vmatpush.msra.mxu0 0.0
  %58 = vmatpush.msra.mxu0 0.0
  %59 = vmatpush.msra.mxu0 0.0
  %60 = vmatpush.msra.mxu0 0.0
  %61 = vmatpush.msra.mxu0 0.0
  %62 = vmatpush.msra.mxu0 0.0
  %63 = vmatpush.msra.mxu0 0.0
  %64 = vmatpush.msra.mxu0 0.0
  %65 = vmatpush.msra.mxu0 0.0
  %66 = vmatpush.msra.mxu0 %v13
  %67 = vmatmul.f32.gmra.mxu0 %v49
  %v68 = vpop.f32.mrf.mxu0
  %v69 = vadd.f32 0.0, %v68
  %70 = vdwg.mxu0
  %v71 = vmul.f32 %v69, %v69
  %vm72 = vcmask 1040384
  %v73 = vsel %vm72, %v71, 0.0
  %74 = vadd.xlane.f32.xlu0 %v73
  %v75 = vpop.xlane.xlu0 %74
  %v76 = vrot.slane %v75, 4
  %v77 = vadd.f32 %v75, %v76
  %v78 = vrot.slane %v77, 2
  %v79 = vadd.f32 %v77, %v78
  %v80 = vrot.slane %v79, 1
  %v81 = vadd.f32 %v79, %v80
  %s82 = vtos %v81
  %v83 = vstv %s82
  %v84 = vrsqrt.pop %v83
  %v85 = vmul.f32 %v84, %v83
  %v86 = vmul.f32 %v85, %v84
  %v87 = vmul.f32 0.5, %v86
  %v88 = vsub.f32 1.5, %v87
  %v89 = vmul.f32 %v84, %v88
  %v90 = vmul.f32 %v83, %v89
  %vm91 = vcmp.eq.f32.partialorder %v83, inf
  %v92 = vsel %vm91, %v83, %v90
  %vm93 = vcmp.eq.f32.partialorder %v83, 0.0
  %v94 = vand.u32 %v83, 2147483648
  %v95 = vsel %vm93, %v94, %v92
  %s96 = vtos %v95
  %s97 = sadd.f32 %s96, 1e-12
  %v98 = vstv %s97
  %v99 = vrcp.pop %v98
  %v100 = vmul.f32 %v98, %v99
  %v101 = vsub.f32 1.0, %v100
  %v102 = vmul.f32 %v99, %v101
  %v103 = vadd.f32 %v99, %v102
  %vm104 = vweird.f32 %v98
  %vm105 = vweird.f32 %v99
  %vm106 = vmor %vm104, %vm105
  %v107 = vsel %vm106, %v99, %v103
  %v108 = vand.u32 2147483647, %v98
  %vm109 = vcmp.eq.f32.partialorder %v108, 8.507059e+37
  %v110 = vand.u32 %v98, 2147483648
  %v111 = vor.u32 1.1754944e-38, %v110
  %v112 = vsel %vm109, %v111, %v107
  %s113 = vtos %v112
  %v114 = vstv %s113
  %v115 = vmul.f32 %v69, %v114
  %v116 = vperm.slane %v115, 0
  %v117 = vmul.f32 %v13, %v116
  %118 = vadd.xlane.f32.xlu0 %v117
  %v119 = vpop.xlane.xlu0 %118
  %v120 = vmul.f32 %v119, %v119
  %vm121 = vcmask 7168
  %v122 = vsel %vm121, %v120, 0.0
  %123 = vadd.xlane.f32.xlu0 %v122
  %v124 = vpop.xlane.xlu0 %123
  %v125 = vrot.slane %v124, 4
  %v126 = vadd.f32 %v124, %v125
  %v127 = vrot.slane %v126, 2
  %v128 = vadd.f32 %v126, %v127
  %v129 = vrot.slane %v128, 1
  %v130 = vadd.f32 %v128, %v129
  %s131 = vtos %v130
  %v132 = vstv %s131
  %v133 = vrsqrt.pop %v132
  %v134 = vmul.f32 %v133, %v132
  %v135 = vmul.f32 %v134, %v133
  %v136 = vmul.f32 0.5, %v135
  %v137 = vsub.f32 1.5, %v136
  %v138 = vmul.f32 %v133, %v137
  %v139 = vmul.f32 %v132, %v138
  %vm140 = vcmp.eq.f32.partialorder %v132, inf
  %v141 = vsel %vm140, %v132, %v139
  %vm142 = vcmp.eq.f32.partialorder %v132, 0.0
  %v143 = vand.u32 %v132, 2147483648
  %v144 = vsel %vm142, %v143, %v141
  %s145 = vtos %v144
  %s146 = sadd.f32 %s145, 1e-12
  %v147 = vstv %s146
  %v148 = vrcp.pop %v147
  %v149 = vmul.f32 %v147, %v148
  %v150 = vsub.f32 1.0, %v149
  %v151 = vmul.f32 %v148, %v150
  %v152 = vadd.f32 %v148, %v151
  %vm153 = vweird.f32 %v147
  %vm154 = vweird.f32 %v148
  %vm155 = vmor %vm153, %vm154
  %v156 = vsel %vm155, %v148, %v152
  %v157 = vand.u32 2147483647, %v147
  %vm158 = vcmp.eq.f32.partialorder %v157, 8.507059e+37
  %v159 = vand.u32 %v147, 2147483648
  %v160 = vor.u32 1.1754944e-38, %v159
  %v161 = vsel %vm158, %v160, %v156
  %s162 = vtos %v161
  %v163 = vstv %s162
  %v164 = vmul.f32 %v119, %v163
  %s165 = smul.f32 %s145, %s145
  %v166 = vstv %s146
  %v167 = vrcp.pop %v166
  %v168 = vmul.f32 %v166, %v167
  %v169 = vsub.f32 1.0, %v168
  %v170 = vmul.f32 %v167, %v169
  %v171 = vadd.f32 %v167, %v170
  %vm172 = vweird.f32 %v166
  %vm173 = vweird.f32 %v167
  %vm174 = vmor %vm172, %vm173
  %v175 = vsel %vm174, %v167, %v171
  %v176 = vand.u32 2147483647, %v166
  %vm177 = vcmp.eq.f32.partialorder %v176, 8.507059e+37
  %v178 = vand.u32 %v166, 2147483648
  %v179 = vor.u32 1.1754944e-38, %v178
  %v180 = vsel %vm177, %v179, %v175
  %s181 = vtos %v180
  %s182 = smul.f32 %s165, %s181
  %v183 = vstv %s182
  %v184 = vrcp.pop %v183
  %v185 = vmul.f32 %v183, %v184
  %v186 = vsub.f32 1.0, %v185
  %v187 = vmul.f32 %v184, %v186
  %v188 = vadd.f32 %v184, %v187
  %vm189 = vweird.f32 %v183
  %vm190 = vweird.f32 %v184
  %vm191 = vmor %vm189, %vm190
  %v192 = vsel %vm191, %v184, %v188
  %v193 = vand.u32 2147483647, %v183
  %vm194 = vcmp.eq.f32.partialorder %v193, 8.507059e+37
  %v195 = vand.u32 %v183, 2147483648
  %v196 = vor.u32 1.1754944e-38, %v195
  %v197 = vsel %vm194, %v196, %v192
  %s198 = vtos %v197
  %v199 = vstv %s198
  %v200 = vmul.f32 %v13, %v199
  %201 = vst [vmem:[%s2] sm:$0xff] %v200
  %202 = vst.msk [vmem:[%s3] sm:$0xff] %vm121, %v164
  // Predicated region
  $region10: #{spectral_norm.1} parent=0 // pred_check
    _
  $region11: #{spectral_norm.1} parent=0 // pred_check_branch
    %204 = sbr.rel (0) target = $region13
  $region12: #{spectral_norm.1} parent=0 // pred_region
    _
  $region13: #{spectral_norm.1} parent=0 // pred_fallthru
    _
  // Predicated region
  $region14: #{spectral_norm.1} parent=0 // pred_check
    _
  $region15: #{spectral_norm.1} parent=0 // pred_check_branch
    %206 = sbr.rel (0) target = $region17
  $region16: #{spectral_norm.1} parent=0 // pred_region
    _
  $region17: #{spectral_norm.1} parent=0 // pred_fallthru
    _
  // Predicated region
  $region18: #{spectral_norm.1} parent=0 // pred_check
    _
  $region19: #{spectral_norm.1} parent=0 // pred_check_branch
    %208 = sbr.rel (0) target = $region21
  $region20: #{spectral_norm.1} parent=0 // pred_region
    _
  $region21: #{spectral_norm.1} parent=0 // pred_fallthru
    _
  // Predicated region
  $region22: #{spectral_norm.1} parent=0 // pred_check
    _
  $region23: #{spectral_norm.1} parent=0 // pred_check_branch
    %210 = sbr.rel (0) target = $region25
  $region24: #{spectral_norm.1} parent=0 // pred_region
    _
  $region25: #{spectral_norm.1} parent=0 // pred_fallthru
    _

</llo_original>
